<compile_context>
chip_gen: v7x
topology: tpu7x:2x2x1
jax: 0.10.0
libtpu: 0.0.40
codegen_flags: <defaults>
</compile_context>

<pallas_src>
import jax
import jax.numpy as jnp
from jax.experimental import pallas as pl
from jax.experimental.pallas import tpu as pltpu

OBS_SPACE = 12
ACTION_SPACE = 3
H1 = 128
H2 = 64

# Packed-parameter layout: one (P_ROWS, 128) f32 buffer (all offsets sublane-aligned).
W1_ROWS = 16                       # 16-row block reserved for w1 (only rows 0..11 used)
ROW_W1 = 0                         # rows   0..15 : w1 (12,128), rows 12..15 zero
ROW_W2 = ROW_W1 + W1_ROWS          # rows  16..143: w2 (128,64) zero-padded to (128,128)
ROW_WH = ROW_W2 + H1               # rows 144..271: fused head [wc|wa|0]; row 64 = [bc|ba|0]
ROW_B = ROW_WH + H1                # rows 272..279: b1 / b2(+const-1 lane) / masks
P_ROWS = ROW_B + 8
P_LANES = 128

NEG_MASK = -1e30                   # large finite negative (avoids any inf-inf NaN path)


def rl_agent_kernel(x_ref, p_ref, out_ref):
    x = x_ref[...]                                        # (tb, 12)

    w1 = p_ref[ROW_W1:ROW_W1 + OBS_SPACE, :]              # (12, 128)
    w2 = p_ref[ROW_W2:ROW_W2 + H1, :]                     # (128, 128), lanes >= 64 zero
    wh = p_ref[ROW_WH:ROW_WH + H1, :]                     # (128, 128), rows  >= 65 zero
    bm = p_ref[ROW_B:ROW_B + 8, :]                        # (8, 128) bias / mask tile
    b1 = bm[0:1, :]                                       # linear1 bias
    b2 = bm[1:2, :]                                       # linear2 bias; lane 64 == 1.0
    neg = bm[2:3, :]                                      # 0 on logit lanes 1..3, -1e30 else
    vmask = bm[3:4, :]                                    # 1 on lane 0, 0 elsewhere

    h1 = jnp.maximum(jnp.dot(x, w1, preferred_element_type=jnp.float32) + b1, 0.0)
    # b2 lane 64 == 1 and w2 lane 64 == 0  =>  h2[:, 64] == 1 after ReLU,
    # so the fused-head bias (wh row 64 = [bc | ba]) is applied by the matmul itself.
    h2 = jnp.maximum(jnp.dot(h1, w2, preferred_element_type=jnp.float32) + b2, 0.0)
    y = jnp.dot(h2, wh, preferred_element_type=jnp.float32)       # (tb, 128)

    # lane 0: critic value; lanes 1..3: actor logits. Mask rows replace iota/select.
    masked = y + neg                                      # logits kept, rest ~ -1e30
    m = jnp.max(masked, axis=-1, keepdims=True)
    e = jnp.exp(masked - m)                               # exactly 0 outside logit lanes
    denom = jnp.sum(e, axis=-1, keepdims=True)
    out_ref[...] = e / denom + y * vmask                  # lane 0: value, 1..3: policy, rest 0


def rl_agent_forward(state, packed_params, *, batch_tile=4096):
    """state: (OBS_SPACE,) or (B, OBS_SPACE) f32 -> (value (B,1), policy (B,3))."""
    x = jnp.asarray(state, jnp.float32)
    if x.ndim == 1:
        x = x.reshape(1, OBS_SPACE)                       # torch .unsqueeze(0)
    b = x.shape[0]

    if b <= batch_tile:
        # Common RL-step path: whole batch in ONE grid step, states passed through with
        # no wrapper-side pad/copy (full-extent blocks need no (8,128) alignment).
        tb, b_pad, grid, x_in = b, b, (1,), x
    else:
        # Very large vectorized rollouts: tile the batch (8-aligned tile, zero-pad rows).
        # TODO(synk): on v7x one could round the tile so the tile count is even (2 TCs).
        tb = -(-batch_tile // 8) * 8
        b_pad = -(-b // tb) * tb
        grid = (b_pad // tb,)
        x_in = jnp.zeros((b_pad, OBS_SPACE), jnp.float32).at[:b].set(x)

    out = pl.pallas_call(
        rl_agent_kernel,
        out_shape=jax.ShapeDtypeStruct((b_pad, P_LANES), jnp.float32),
        grid_spec=pltpu.PrefetchScalarGridSpec(
            num_scalar_prefetch=0,
            grid=grid,
            in_specs=[
                pl.BlockSpec((tb, OBS_SPACE), lambda i: (i, 0)),
                # constant block index: weights stay VMEM-resident across batch tiles
                pl.BlockSpec((P_ROWS, P_LANES), lambda i: (0, 0)),
            ],
            out_specs=pl.BlockSpec((tb, P_LANES), lambda i: (i, 0)),
        ),
        compiler_params=pltpu.CompilerParams(
            dimension_semantics=("parallel",)),
    )(x_in, packed_params)

    value = out[:b, 0:1]
    policy = out[:b, 1:1 + ACTION_SPACE]
    return value, policy


def init_params(key):
    """PyTorch nn.Linear default init (U[-1/sqrt(fan_in), +]); weights stored (in, out)."""
    def linear(key, fan_in, fan_out):
        kw, kb = jax.random.split(key)
        bound = 1.0 / jnp.sqrt(jnp.float32(fan_in))
        w = jax.random.uniform(kw, (fan_in, fan_out), jnp.float32, -bound, bound)
        b = jax.random.uniform(kb, (1, fan_out), jnp.float32, -bound, bound)
        return w, b

    k1, k2, k3, k4 = jax.random.split(key, 4)
    w1, b1 = linear(k1, OBS_SPACE, H1)
    w2, b2 = linear(k2, H1, H2)
    wc, bc = linear(k3, H2, 1)
    wa, ba = linear(k4, H2, ACTION_SPACE)
    return (w1, b1, w2, b2, wc, bc, wa, ba)


def pack_params(params):
    """Pack all 8 tensors (+ softmax/value mask rows) into one (P_ROWS, 128) f32 buffer."""
    w1, b1, w2, b2, wc, bc, wa, ba = params
    p = jnp.zeros((P_ROWS, P_LANES), jnp.float32)
    p = p.at[ROW_W1:ROW_W1 + OBS_SPACE, :H1].set(w1)
    p = p.at[ROW_W2:ROW_W2 + H1, :H2].set(w2)
    # fused critic/actor head; row H2(=64) carries the head bias via the constant-1 lane
    p = p.at[ROW_WH:ROW_WH + H2, 0:1].set(wc)
    p = p.at[ROW_WH:ROW_WH + H2, 1:1 + ACTION_SPACE].set(wa)
    p = p.at[ROW_WH + H2, 0].set(bc[0, 0])
    p = p.at[ROW_WH + H2, 1:1 + ACTION_SPACE].set(ba[0])
    # bias / mask tile
    p = p.at[ROW_B + 0, :H1].set(b1[0])
    p = p.at[ROW_B + 1, :H2].set(b2[0])
    p = p.at[ROW_B + 1, H2].set(1.0)                       # constant-1 lane for head bias
    neg_row = jnp.full((P_LANES,), NEG_MASK, jnp.float32).at[1:1 + ACTION_SPACE].set(0.0)
    p = p.at[ROW_B + 2].set(neg_row)                       # additive logit mask
    p = p.at[ROW_B + 3, 0].set(1.0)                        # value-lane selector
    return p


def reference_forward(x, params):
    w1, b1, w2, b2, wc, bc, wa, ba = params
    h1 = jnp.maximum(x @ w1 + b1, 0.0)
    h2 = jnp.maximum(h1 @ w2 + b2, 0.0)
    value = h2 @ wc + bc
    policy = jax.nn.softmax(h2 @ wa + ba, axis=1)
    return value, policy


if __name__ == "__main__":
    key = jax.random.PRNGKey(0)
    k_params, k_state, k_batch, k_tiled = jax.random.split(key, 4)

    params = init_params(k_params)
    packed = pack_params(params)
    fwd = jax.jit(rl_agent_forward)

    # 1) single observation: exactly the torch forward (state -> unsqueeze(0))
    state = jax.random.normal(k_state, (OBS_SPACE,), jnp.float32)
    value, policy = fwd(state, packed)
    jax.block_until_ready((value, policy))

    v_ref, p_ref = reference_forward(state.reshape(1, OBS_SPACE), params)
    assert value.shape == (1, 1) and policy.shape == (1, ACTION_SPACE)
    assert jnp.allclose(value, v_ref, atol=1e-4, rtol=1e-4)
    assert jnp.allclose(policy, p_ref, atol=1e-4, rtol=1e-4)
    assert jnp.allclose(jnp.sum(policy, axis=-1), 1.0, atol=1e-5)

    # 2) batched rollout (256 env states) -> single grid step, no wrapper padding
    states = jax.random.normal(k_batch, (256, OBS_SPACE), jnp.float32)
    vb, pb = fwd(states, packed)
    jax.block_until_ready((vb, pb))

    vb_ref, pb_ref = reference_forward(states, params)
    assert vb.shape == (256, 1) and pb.shape == (256, ACTION_SPACE)
    assert jnp.allclose(vb, vb_ref, atol=1e-4, rtol=1e-4)
    assert jnp.allclose(pb, pb_ref, atol=1e-4, rtol=1e-4)
    assert jnp.allclose(jnp.sum(pb, axis=-1), 1.0, atol=1e-5)

    # 3) exercise the tiled (large-rollout) path: batch 200 with a 64-row tile
    states_t = jax.random.normal(k_tiled, (200, OBS_SPACE), jnp.float32)
    vt, pt = jax.jit(lambda s, p: rl_agent_forward(s, p, batch_tile=64))(states_t, packed)
    jax.block_until_ready((vt, pt))

    vt_ref, pt_ref = reference_forward(states_t, params)
    assert vt.shape == (200, 1) and pt.shape == (200, ACTION_SPACE)
    assert jnp.allclose(vt, vt_ref, atol=1e-4, rtol=1e-4)
    assert jnp.allclose(pt, pt_ref, atol=1e-4, rtol=1e-4)
    assert jnp.allclose(jnp.sum(pt, axis=-1), 1.0, atol=1e-5)

    # TODO(synk): Adam optimizer state and torch.save/torch.load checkpointing from the
    # original module are host-side I/O and are intentionally not ported to the kernel.
    print("KERNEL_OK")
</pallas_src>

<mosaic_0001>
module attributes {stable_mosaic.version = 11 : i64} {
  func.func @rl_agent_kernel(%arg0: i32, %arg1: memref<1x12xf32, #tpu.memory_space<vmem>>, %arg2: memref<280x128xf32, #tpu.memory_space<vmem>>, %arg3: memref<1x128xf32, #tpu.memory_space<vmem>>) attributes {dimension_semantics = [#tpu.dimension_semantics<parallel>], iteration_bounds = array<i64: 1>, scalar_prefetch = 0 : i64, scratch_operands = 0 : i64, tpu.core_type = #tpu.core_type<tc>, window_params = [{transform_indices = @transform_0, window_bounds = array<i64: 1, 12>}, {pipeline_mode = #tpu.pipeline_mode<synchronous>, transform_indices = @transform_1, window_bounds = array<i64: 280, 128>}, {transform_indices = @transform_2, window_bounds = array<i64: 1, 128>}]} {
    %c0 = arith.constant 0 : index
    %c0_0 = arith.constant 0 : index
    %0 = vector.load %arg1[%c0, %c0_0] : memref<1x12xf32, #tpu.memory_space<vmem>>, vector<1x12xf32>
    %c0_1 = arith.constant 0 : index
    %c0_2 = arith.constant 0 : index
    %1 = vector.load %arg2[%c0_1, %c0_2] : memref<280x128xf32, #tpu.memory_space<vmem>>, vector<12x128xf32>
    %c16 = arith.constant 16 : index
    %c0_3 = arith.constant 0 : index
    %2 = vector.load %arg2[%c16, %c0_3] : memref<280x128xf32, #tpu.memory_space<vmem>>, vector<128x128xf32>
    %c144 = arith.constant 144 : index
    %c0_4 = arith.constant 0 : index
    %3 = vector.load %arg2[%c144, %c0_4] : memref<280x128xf32, #tpu.memory_space<vmem>>, vector<128x128xf32>
    %c272 = arith.constant 272 : index
    %c0_5 = arith.constant 0 : index
    %4 = vector.load %arg2[%c272, %c0_5] : memref<280x128xf32, #tpu.memory_space<vmem>>, vector<8x128xf32>
    %5 = vector.extract_strided_slice %4 {offsets = [0, 0], sizes = [1, 128], strides = [1, 1]} : vector<8x128xf32> to vector<1x128xf32>
    %6 = vector.extract_strided_slice %4 {offsets = [1, 0], sizes = [1, 128], strides = [1, 1]} : vector<8x128xf32> to vector<1x128xf32>
    %7 = vector.extract_strided_slice %4 {offsets = [2, 0], sizes = [1, 128], strides = [1, 1]} : vector<8x128xf32> to vector<1x128xf32>
    %8 = vector.extract_strided_slice %4 {offsets = [3, 0], sizes = [1, 128], strides = [1, 1]} : vector<8x128xf32> to vector<1x128xf32>
    %cst = arith.constant dense<0.000000e+00> : vector<1x128xf32>
    %9 = tpu.matmul %0, %1, %cst {dimension_numbers = #tpu.dot_dimension_numbers<[1], [0], [0], [1], [0, 0, 1, 1], [], []>} : vector<1x12xf32>, vector<12x128xf32>, vector<1x128xf32> -> vector<1x128xf32>
    %10 = arith.addf %9, %5 : vector<1x128xf32>
    %cst_6 = arith.constant 0.000000e+00 : f32
    %11 = vector.broadcast %cst_6 : f32 to vector<1x128xf32>
    %12 = arith.maximumf %10, %11 : vector<1x128xf32>
    %cst_7 = arith.constant dense<0.000000e+00> : vector<1x128xf32>
    %13 = tpu.matmul %12, %2, %cst_7 {dimension_numbers = #tpu.dot_dimension_numbers<[1], [0], [0], [1], [0, 0, 1, 1], [], []>} : vector<1x128xf32>, vector<128x128xf32>, vector<1x128xf32> -> vector<1x128xf32>
    %14 = arith.addf %13, %6 : vector<1x128xf32>
    %cst_8 = arith.constant 0.000000e+00 : f32
    %15 = vector.broadcast %cst_8 : f32 to vector<1x128xf32>
    %16 = arith.maximumf %14, %15 : vector<1x128xf32>
    %cst_9 = arith.constant dense<0.000000e+00> : vector<1x128xf32>
    %17 = tpu.matmul %16, %3, %cst_9 {dimension_numbers = #tpu.dot_dimension_numbers<[1], [0], [0], [1], [0, 0, 1, 1], [], []>} : vector<1x128xf32>, vector<128x128xf32>, vector<1x128xf32> -> vector<1x128xf32>
    %18 = arith.addf %17, %7 : vector<1x128xf32>
    %cst_10 = arith.constant dense<0xFF800000> : vector<1xf32>
    %19 = vector.multi_reduction <maximumf>, %18, %cst_10 [1] : vector<1x128xf32> to vector<1xf32>
    %20 = vector.shape_cast %19 : vector<1xf32> to vector<1x1xf32>
    %21 = vector.broadcast %20 : vector<1x1xf32> to vector<1x128xf32>
    %22 = arith.subf %18, %21 : vector<1x128xf32>
    %23 = math.exp %22 : vector<1x128xf32>
    %cst_11 = arith.constant dense<0.000000e+00> : vector<1xf32>
    %24 = vector.multi_reduction <add>, %23, %cst_11 [1] : vector<1x128xf32> to vector<1xf32>
    %25 = vector.shape_cast %24 : vector<1xf32> to vector<1x1xf32>
    %26 = vector.broadcast %25 : vector<1x1xf32> to vector<1x128xf32>
    %27 = arith.divf %23, %26 : vector<1x128xf32>
    %28 = arith.mulf %17, %8 : vector<1x128xf32>
    %29 = arith.addf %27, %28 : vector<1x128xf32>
    %c0_12 = arith.constant 0 : index
    %c0_13 = arith.constant 0 : index
    %30 = vector.load %arg3[%c0_12, %c0_13] : memref<1x128xf32, #tpu.memory_space<vmem>>, vector<1x128xf32>
    tpu.vector_store %arg3[%c0_12, %c0_13], %29 {strides = array<i32>} : memref<1x128xf32, #tpu.memory_space<vmem>>, vector<1x128xf32>,
    return
  }
  func.func @transform_0(%arg0: i32) -> (i32, i32) {
    %c0_i32 = arith.constant 0 : i32
    %c0_i32_0 = arith.constant 0 : i32
    return %arg0, %c0_i32 : i32, i32
  }
  func.func @transform_1(%arg0: i32) -> (i32, i32) {
    %c0_i32 = arith.constant 0 : i32
    %c0_i32_0 = arith.constant 0 : i32
    %c0_i32_1 = arith.constant 0 : i32
    return %c0_i32, %c0_i32_0 : i32, i32
  }
  func.func @transform_2(%arg0: i32) -> (i32, i32) {
    %c0_i32 = arith.constant 0 : i32
    %c0_i32_0 = arith.constant 0 : i32
    return %arg0, %c0_i32 : i32, i32
  }
}

</mosaic_0001>

<llo_original>
// kernel: rl_agent_forward.1
$region0: #{rl_agent_forward.1}
  #allocation0 [shape = 'u32[]', space=smem, size = 0x4, offset = 0x4, fixed_abs, tag = 'smem constant byte address 0x4 - core index']
  #allocation1 [shape = 'u32[144,128]{1,0:T(1,128)}', space=vmem, size = 0x12000, scoped, tag = 'internal scratch']
  %s0 = inlined_call_operand.vmem [shape: f32[1,12], index: 0, kind: input, shape index: {}]
  %s1 = inlined_call_operand.hbm [shape: f32[280,128], index: 1, kind: input, shape index: {}]
  %s2 = inlined_call_operand.vmem [shape: f32[1,128], index: 2, kind: output, shape index: {}]
  %s3 = sld [smem:[#allocation0]]
  $region22: #{rl_agent_forward.1} parent=0
    _
  %s5 = ssub.s32 1, %s3
  %s6 = scalar_select 0, %s5, %s3
  $region1: #{rl_agent_forward.1} parent=0
    #allocation2 [shape = 'u8[143360]{0}', space=vmem, size = 0x23000, scoped, tag = 'input window, operand 1, single buffered']
    #allocation3 [shape = 's32[1]{0}', space=sflag, size = 0x4, scoped, tag = 'scoped memory for rl_agent_forward.1']
    %7 = vsyncpa [#allocation3], 0
    // Predicated region
    $region2: #{rl_agent_forward.1} parent=1 // pred_check
      _
    $region3: #{rl_agent_forward.1} parent=1 // pred_check_branch
      %9 = sbr.rel (0) target = $region5
    $region4: #{rl_agent_forward.1} parent=1 // pred_region
      _
    $region5: #{rl_agent_forward.1} parent=1 // pred_fallthru
      _
    // Predicated region
    $region6: #{rl_agent_forward.1} parent=1 // pred_check
      _
    $region7: #{rl_agent_forward.1} parent=1 // pred_check_branch
      %11 = sbr.rel (0) target = $region9
    $region8: #{rl_agent_forward.1} parent=1 // pred_region
      %s13 = ssub.s32 4480, 4480
      %14 = vsyncadd [#allocation3], %s13
      %s15 = sshll.u32 [#allocation2], 4
      %s16 = int_to_ptr.vmem [resolvable:$true] %s15
      %21 = dma.hbm_to_vmem [thread:$0]  %s1, 4480, %s16, [#allocation3], 128, 128, 8
    $region9: #{rl_agent_forward.1} parent=1 // pred_fallthru
      _
    // Predicated region
    $region10: #{rl_agent_forward.1} parent=1 // pred_check
      _
    $region11: #{rl_agent_forward.1} parent=1 // pred_check_branch
      %23 = sbr.rel (0) target = $region13
    $region12: #{rl_agent_forward.1} parent=1 // pred_region
      %24 = dma.done [#allocation3], 4480
    $region13: #{rl_agent_forward.1} parent=1 // pred_fallthru
      _
    %v25 = vld [vmem:[%s0] sm:$0x1]
    %v26 = vld [vmem:[#allocation2] sm:$0xff]
    %v27 = vld [vmem:[#allocation2 + $0x8] sm:$0xf]
    %v28 = vld [vmem:[#allocation2 + $0x10] sm:$0xff]
    %v29 = vld [vmem:[#allocation2 + $0x18] sm:$0xff]
    %v30 = vld [vmem:[#allocation2 + $0x20] sm:$0xff]
    %v31 = vld [vmem:[#allocation2 + $0x28] sm:$0xff]
    %v32 = vld [vmem:[#allocation2 + $0x30] sm:$0xff]
    %v33 = vld [vmem:[#allocation2 + $0x38] sm:$0xff]
    %v34 = vld [vmem:[#allocation2 + $0x40] sm:$0xff]
    %v35 = vld [vmem:[#allocation2 + $0x48] sm:$0xff]
    %v36 = vld [vmem:[#allocation2 + $0x50] sm:$0xff]
    %v37 = vld [vmem:[#allocation2 + $0x58] sm:$0xff]
    %v38 = vld [vmem:[#allocation2 + $0x60] sm:$0xff]
    %v39 = vld [vmem:[#allocation2 + $0x68] sm:$0xff]
    %v40 = vld [vmem:[#allocation2 + $0x70] sm:$0xff]
    %v41 = vld [vmem:[#allocation2 + $0x78] sm:$0xff]
    %v42 = vld [vmem:[#allocation2 + $0x80] sm:$0xff]
    %v43 = vld [vmem:[#allocation2 + $0x88] sm:$0xff]
    %v44 = vld [vmem:[#allocation2 + $0x90] sm:$0xff]
    %v45 = vld [vmem:[#allocation2 + $0x98] sm:$0xff]
    %v46 = vld [vmem:[#allocation2 + $0xa0] sm:$0xff]
    %v47 = vld [vmem:[#allocation2 + $0xa8] sm:$0xff]
    %v48 = vld [vmem:[#allocation2 + $0xb0] sm:$0xff]
    %v49 = vld [vmem:[#allocation2 + $0xb8] sm:$0xff]
    %v50 = vld [vmem:[#allocation2 + $0xc0] sm:$0xff]
    %v51 = vld [vmem:[#allocation2 + $0xc8] sm:$0xff]
    %v52 = vld [vmem:[#allocation2 + $0xd0] sm:$0xff]
    %v53 = vld [vmem:[#allocation2 + $0xd8] sm:$0xff]
    %v54 = vld [vmem:[#allocation2 + $0xe0] sm:$0xff]
    %v55 = vld [vmem:[#allocation2 + $0xe8] sm:$0xff]
    %v56 = vld [vmem:[#allocation2 + $0xf0] sm:$0xff]
    %v57 = vld [vmem:[#allocation2 + $0xf8] sm:$0xff]
    %v58 = vld [vmem:[#allocation2 + $0x100] sm:$0xff]
    %v59 = vld [vmem:[#allocation2 + $0x108] sm:$0xff]
    %v60 = vld [vmem:[#allocation2 + $0x110] sm:$0xff]
    %vm61 = vcmask 97280
    %v63 = vsel %vm61, %v25, 0
    %vm65 = vcmask 1043456
    %v67 = vsel %vm65, %v27, 0
    %69 = vmatprep.subr.mxu0 0.0
    %70 = vmatpush1.msra.mxu0 %v26
    %71 = vmatprep.subr.mxu0 0.0
    %72 = vmatpush1.msra.mxu0 %v67
    %73 = vmatprep.subr.mxu0 0.0
    %74 = vmatpush1.msra.mxu0 0.0
    %75 = vmatprep.subr.mxu0 0.0
    %76 = vmatpush1.msra.mxu0 0.0
    %77 = vmatprep.subr.mxu0 0.0
    %78 = vmatpush1.msra.mxu0 0.0
    %79 = vmatprep.subr.mxu0 0.0
    %80 = vmatpush1.msra.mxu0 0.0
    %81 = vmatprep.subr.mxu0 0.0
    %82 = vmatpush1.msra.mxu0 0.0
    %83 = vmatprep.subr.mxu0 0.0
    %84 = vmatpush1.msra.mxu0 0.0
    %85 = vmatprep.subr.mxu0 0.0
    %86 = vmatpush1.msra.mxu0 0.0
    %87 = vmatprep.subr.mxu0 0.0
    %88 = vmatpush1.msra.mxu0 0.0
    %89 = vmatprep.subr.mxu0 0.0
    %90 = vmatpush1.msra.mxu0 0.0
    %91 = vmatprep.subr.mxu0 0.0
    %92 = vmatpush1.msra.mxu0 0.0
    %93 = vmatprep.subr.mxu0 0.0
    %94 = vmatpush1.msra.mxu0 0.0
    %95 = vmatprep.subr.mxu0 0.0
    %96 = vmatpush1.msra.mxu0 0.0
    %97 = vmatprep.subr.mxu0 0.0
    %98 = vmatpush1.msra.mxu0 0.0
    %99 = vmatprep.subr.mxu0 0.0
    %100 = vmatpush1.msra.mxu0 0.0
    %101 = vmatprep.subr.mxu0 0.0
    %102 = vmatpush1.msra.mxu0 0.0
    %103 = vmatprep.subr.mxu0 0.0
    %104 = vmatpush1.msra.mxu0 0.0
    %105 = vmatprep.subr.mxu0 0.0
    %106 = vmatpush1.msra.mxu0 0.0
    %107 = vmatprep.subr.mxu0 0.0
    %108 = vmatpush1.msra.mxu0 0.0
    %109 = vmatprep.subr.mxu0 0.0
    %110 = vmatpush1.msra.mxu0 0.0
    %111 = vmatprep.subr.mxu0 0.0
    %112 = vmatpush1.msra.mxu0 0.0
    %113 = vmatprep.subr.mxu0 0.0
    %114 = vmatpush1.msra.mxu0 0.0
    %115 = vmatprep.subr.mxu0 0.0
    %116 = vmatpush1.msra.mxu0 0.0
    %117 = vmatprep.subr.mxu0 0.0
    %118 = vmatpush1.msra.mxu0 0.0
    %119 = vmatprep.subr.mxu0 0.0
    %120 = vmatpush1.msra.mxu0 0.0
    %121 = vmatprep.subr.mxu0 0.0
    %122 = vmatpush1.msra.mxu0 0.0
    %123 = vmatprep.subr.mxu0 0.0
    %124 = vmatpush1.msra.mxu0 0.0
    %125 = vmatprep.subr.mxu0 0.0
    %126 = vmatpush1.msra.mxu0 0.0
    %127 = vmatprep.subr.mxu0 0.0
    %128 = vmatpush1.msra.mxu0 0.0
    %129 = vmatprep.subr.mxu0 0.0
    %130 = vmatpush1.msra.mxu0 0.0
    %131 = vmatprep.subr.mxu0 0.0
    %132 = vmatpush1.msra.mxu0 0.0
    %133 = vmatprep.mubr.f32.mxu0 0.0
    %134 = vmatmul.mubr.f32.gmra.mrb[0].mxu0 %v63
    %v135 = vpop.f32.mrb[0].mxu0
    %v136 = vadd.f32 %v60, %v135
    %v137 = vpop.f32.mrb[0].mxu0
    %138 = vdwg.mxu0
    %v139 = vmax.f32 %v136, 0.0
    %v141 = vrot.slane %v60, 1
    %143 = vmatprep.subr.mxu0 0.0
    %144 = vmatpush1.msra.mxu0 %v28
    %145 = vmatprep.subr.mxu0 0.0
    %146 = vmatpush1.msra.mxu0 %v29
    %147 = vmatprep.subr.mxu0 0.0
    %148 = vmatpush1.msra.mxu0 %v30
    %149 = vmatprep.subr.mxu0 0.0
    %150 = vmatpush1.msra.mxu0 %v31
    %151 = vmatprep.subr.mxu0 0.0
    %152 = vmatpush1.msra.mxu0 %v32
    %153 = vmatprep.subr.mxu0 0.0
    %154 = vmatpush1.msra.mxu0 %v33
    %155 = vmatprep.subr.mxu0 0.0
    %156 = vmatpush1.msra.mxu0 %v34
    %157 = vmatprep.subr.mxu0 0.0
    %158 = vmatpush1.msra.mxu0 %v35
    %159 = vmatprep.subr.mxu0 0.0
    %160 = vmatpush1.msra.mxu0 %v36
    %161 = vmatprep.subr.mxu0 0.0
    %162 = vmatpush1.msra.mxu0 %v37
    %163 = vmatprep.subr.mxu0 0.0
    %164 = vmatpush1.msra.mxu0 %v38
    %165 = vmatprep.subr.mxu0 0.0
    %166 = vmatpush1.msra.mxu0 %v39
    %167 = vmatprep.subr.mxu0 0.0
    %168 = vmatpush1.msra.mxu0 %v40
    %169 = vmatprep.subr.mxu0 0.0
    %170 = vmatpush1.msra.mxu0 %v41
    %171 = vmatprep.subr.mxu0 0.0
    %172 = vmatpush1.msra.mxu0 %v42
    %173 = vmatprep.subr.mxu0 0.0
    %174 = vmatpush1.msra.mxu0 %v43
    %175 = vmatprep.subr.mxu0 0.0
    %176 = vmatpush1.msra.mxu0 0.0
    %177 = vmatprep.subr.mxu0 0.0
    %178 = vmatpush1.msra.mxu0 0.0
    %179 = vmatprep.subr.mxu0 0.0
    %180 = vmatpush1.msra.mxu0 0.0
    %181 = vmatprep.subr.mxu0 0.0
    %182 = vmatpush1.msra.mxu0 0.0
    %183 = vmatprep.subr.mxu0 0.0
    %184 = vmatpush1.msra.mxu0 0.0
    %185 = vmatprep.subr.mxu0 0.0
    %186 = vmatpush1.msra.mxu0 0.0
    %187 = vmatprep.subr.mxu0 0.0
    %188 = vmatpush1.msra.mxu0 0.0
    %189 = vmatprep.subr.mxu0 0.0
    %190 = vmatpush1.msra.mxu0 0.0
    %191 = vmatprep.subr.mxu0 0.0
    %192 = vmatpush1.msra.mxu0 0.0
    %193 = vmatprep.subr.mxu0 0.0
    %194 = vmatpush1.msra.mxu0 0.0
    %195 = vmatprep.subr.mxu0 0.0
    %196 = vmatpush1.msra.mxu0 0.0
    %197 = vmatprep.subr.mxu0 0.0
    %198 = vmatpush1.msra.mxu0 0.0
    %199 = vmatprep.subr.mxu0 0.0
    %200 = vmatpush1.msra.mxu0 0.0
    %201 = vmatprep.subr.mxu0 0.0
    %202 = vmatpush1.msra.mxu0 0.0
    %203 = vmatprep.subr.mxu0 0.0
    %204 = vmatpush1.msra.mxu0 0.0
    %205 = vmatprep.subr.mxu0 0.0
    %206 = vmatpush1.msra.mxu0 0.0
    %207 = vmatprep.mubr.f32.mxu0 0.0
    %208 = vmatmul.mubr.f32.gmra.mrb[0].mxu0 %v139
    %v209 = vpop.f32.mrb[0].mxu0
    %v210 = vadd.f32 %v141, %v209
    %v211 = vpop.f32.mrb[0].mxu0
    %212 = vdwg.mxu0
    %v213 = vmax.f32 %v210, 0.0
    %214 = vmatprep.subr.mxu0 0.0
    %215 = vmatpush1.msra.mxu0 %v44
    %216 = vmatprep.subr.mxu0 0.0
    %217 = vmatpush1.msra.mxu0 %v45
    %218 = vmatprep.subr.mxu0 0.0
    %219 = vmatpush1.msra.mxu0 %v46
    %220 = vmatprep.subr.mxu0 0.0
    %221 = vmatpush1.msra.mxu0 %v47
    %222 = vmatprep.subr.mxu0 0.0
    %223 = vmatpush1.msra.mxu0 %v48
    %224 = vmatprep.subr.mxu0 0.0
    %225 = vmatpush1.msra.mxu0 %v49
    %226 = vmatprep.subr.mxu0 0.0
    %227 = vmatpush1.msra.mxu0 %v50
    %228 = vmatprep.subr.mxu0 0.0
    %229 = vmatpush1.msra.mxu0 %v51
    %230 = vmatprep.subr.mxu0 0.0
    %231 = vmatpush1.msra.mxu0 %v52
    %232 = vmatprep.subr.mxu0 0.0
    %233 = vmatpush1.msra.mxu0 %v53
    %234 = vmatprep.subr.mxu0 0.0
    %235 = vmatpush1.msra.mxu0 %v54
    %236 = vmatprep.subr.mxu0 0.0
    %237 = vmatpush1.msra.mxu0 %v55
    %238 = vmatprep.subr.mxu0 0.0
    %239 = vmatpush1.msra.mxu0 %v56
    %240 = vmatprep.subr.mxu0 0.0
    %241 = vmatpush1.msra.mxu0 %v57
    %242 = vmatprep.subr.mxu0 0.0
    %243 = vmatpush1.msra.mxu0 %v58
    %244 = vmatprep.subr.mxu0 0.0
    %245 = vmatpush1.msra.mxu0 %v59
    %246 = vmatprep.subr.mxu0 0.0
    %247 = vmatpush1.msra.mxu0 0.0
    %248 = vmatprep.subr.mxu0 0.0
    %249 = vmatpush1.msra.mxu0 0.0
    %250 = vmatprep.subr.mxu0 0.0
    %251 = vmatpush1.msra.mxu0 0.0
    %252 = vmatprep.subr.mxu0 0.0
    %253 = vmatpush1.msra.mxu0 0.0
    %254 = vmatprep.subr.mxu0 0.0
    %255 = vmatpush1.msra.mxu0 0.0
    %256 = vmatprep.subr.mxu0 0.0
    %257 = vmatpush1.msra.mxu0 0.0
    %258 = vmatprep.subr.mxu0 0.0
    %259 = vmatpush1.msra.mxu0 0.0
    %260 = vmatprep.subr.mxu0 0.0
    %261 = vmatpush1.msra.mxu0 0.0
    %262 = vmatprep.subr.mxu0 0.0
    %263 = vmatpush1.msra.mxu0 0.0
    %264 = vmatprep.subr.mxu0 0.0
    %265 = vmatpush1.msra.mxu0 0.0
    %266 = vmatprep.subr.mxu0 0.0
    %267 = vmatpush1.msra.mxu0 0.0
    %268 = vmatprep.subr.mxu0 0.0
    %269 = vmatpush1.msra.mxu0 0.0
    %270 = vmatprep.subr.mxu0 0.0
    %271 = vmatpush1.msra.mxu0 0.0
    %272 = vmatprep.subr.mxu0 0.0
    %273 = vmatpush1.msra.mxu0 0.0
    %274 = vmatprep.subr.mxu0 0.0
    %275 = vmatpush1.msra.mxu0 0.0
    %276 = vmatprep.subr.mxu0 0.0
    %277 = vmatpush1.msra.mxu0 0.0
    %278 = vmatprep.mubr.f32.mxu0 0.0
    %279 = vmatmul.mubr.f32.gmra.mrb[0].mxu0 %v213
    %v280 = vpop.f32.mrb[0].mxu0
    %v281 = vadd.f32 0.0, %v280
    %v282 = vpop.f32.mrb[0].mxu0
    %283 = vdwg.mxu0
    %v284 = vrot.slane %v60, 2
    %v286 = vadd.f32 %v281, %v284
    %vm287 = vcmask 1040384
    %v288 = vsel %vm287, %v286, -inf
    %289 = vmax.xlane.f32.xlu0 %v288
    %v290 = vpop.xlane.xlu0 %289
    %v291 = vsub.f32 %v286, %v290
    %v292 = vmul.f32 %v291, 1.442695
    %v293 = vpow.pop %v292
    %v294 = vsel %vm287, %v293, 0.0
    %295 = vadd.xlane.f32.xlu0 %v294
    %v296 = vpop.xlane.xlu0 %295
    %v297 = vrcp.pop %v296
    %v298 = vmul.f32 %v293, %v297
    %v299 = vrot.slane %v60, 3
    %v301 = vmul.f32 %v281, %v299
    %v302 = vadd.f32 %v298, %v301
    %303 = vst [vmem:[%s2] sm:$0x1] %v302
    // Predicated region
    $region14: #{rl_agent_forward.1} parent=1 // pred_check
      _
    $region15: #{rl_agent_forward.1} parent=1 // pred_check_branch
      %305 = sbr.rel (0) target = $region17
    $region16: #{rl_agent_forward.1} parent=1 // pred_region
      _
    $region17: #{rl_agent_forward.1} parent=1 // pred_fallthru
      _
    // Predicated region
    $region18: #{rl_agent_forward.1} parent=1 // pred_check
      _
    $region19: #{rl_agent_forward.1} parent=1 // pred_check_branch
      %307 = sbr.rel (0) target = $region21
    $region20: #{rl_agent_forward.1} parent=1 // pred_region
      _
    $region21: #{rl_agent_forward.1} parent=1 // pred_fallthru
      _
    %308 = vsyncpa [#allocation3], 1

</llo_original>
